<compile_context>
chip_gen: v5e
topology: v5e:2x2
jax: 0.10.0
libtpu: 0.0.40
codegen_flags: <defaults>
</compile_context>

<pallas_src>
import functools

import jax
import jax.numpy as jnp
from jax.experimental import pallas as pl
from jax.experimental.pallas import tpu as pltpu

_LANE = 128
_TILE_BUDGET_BYTES = 2 * 1024 * 1024   # per pipelined tile (input or output)
_VMEM_LIMIT_BYTES = 32 * 1024 * 1024   # safe on v5e/v6e/v7x


def _layernorm2d_kernel(x_ref, w_ref, b_ref, o_ref, *, eps: float):
    # x_ref: (Bt, C, T)  -- Bt batch samples, channels (sublanes) x spatial (lanes)
    # w_ref, b_ref: (C, 1) -- broadcast over batch and spatial lanes
    x = x_ref[...].astype(jnp.float32)
    u = jnp.mean(x, axis=1, keepdims=True)                 # (Bt, 1, T) sublane reduce (XLU)
    d = x - u
    s = jnp.mean(d * d, axis=1, keepdims=True)             # (Bt, 1, T)
    y = d * jax.lax.rsqrt(s + eps)                         # rsqrt -> EUP slot (free-ish)
    w = w_ref[...].astype(jnp.float32)                     # (C, 1)
    b = b_ref[...].astype(jnp.float32)                     # (C, 1)
    o_ref[...] = (w * y + b).astype(o_ref.dtype)


def layernorm2d(x: jax.Array, weight: jax.Array, bias: jax.Array,
                eps: float = 1e-6) -> jax.Array:
    """x: (B, C, H, W) NCHW; weight, bias: (C,). Returns (B, C, H, W)."""
    B, C, H, W = x.shape
    HW = H * W
    itemsize = jnp.dtype(x.dtype).itemsize

    # --- spatial (lane) tiling: as big as the VMEM budget allows ----------
    max_lanes = max(_LANE, (_TILE_BUDGET_BYTES // (max(C, 1) * itemsize)) // _LANE * _LANE)
    max_lanes = min(max_lanes, 16384)
    if HW <= max_lanes:
        hw_tile = HW                  # full dim: no padding, no masked stores
        n_hw = 1
    else:
        hw_tile = max_lanes           # multiple of 128; only last block partial
        n_hw = pl.cdiv(HW, hw_tile)

    # --- batch tiling: amortize ~0.35us grid-step overhead for tiny maps ---
    bt_cap = max(1, _TILE_BUDGET_BYTES // max(1, C * hw_tile * itemsize))
    Bt = max(1, min(B, bt_cap, 8))
    n_b = pl.cdiv(B, Bt)

    x_flat = x.reshape(B, C, HW)      # metadata-only reshape, no HBM copy
    w2d = weight.reshape(C, 1)
    b2d = bias.reshape(C, 1)

    kernel = functools.partial(_layernorm2d_kernel, eps=float(eps))

    cost = pl.CostEstimate(
        flops=7 * B * C * HW,
        transcendentals=B * HW,
        bytes_accessed=2 * B * C * HW * itemsize
        + 2 * C * jnp.dtype(weight.dtype).itemsize,
    )

    out = pl.pallas_call(
        kernel,
        out_shape=jax.ShapeDtypeStruct((B, C, HW), x.dtype),
        grid_spec=pltpu.PrefetchScalarGridSpec(
            num_scalar_prefetch=0,
            grid=(n_b, n_hw),
            in_specs=[
                # (Bt, C, hw_tile) block; channel (reduction) axis never split.
                pl.BlockSpec((Bt, C, hw_tile), lambda bi, si: (bi, 0, si)),
                pl.BlockSpec((C, 1), lambda bi, si: (0, 0)),
                pl.BlockSpec((C, 1), lambda bi, si: (0, 0)),
            ],
            out_specs=pl.BlockSpec((Bt, C, hw_tile), lambda bi, si: (bi, 0, si)),
        ),
        compiler_params=pltpu.CompilerParams(
            # Both axes independent -> shard across v7x's two TensorCores.
            dimension_semantics=("parallel", "parallel"),
            vmem_limit_bytes=_VMEM_LIMIT_BYTES,
        ),
        cost_estimate=cost,
    )(x_flat, w2d, b2d)

    return out.reshape(B, C, H, W)


if __name__ == "__main__":
    # Deterministic inputs consistent with the module's forward pass.
    B, C, H, W = 2, 4, 16, 16
    key = jax.random.PRNGKey(0)
    kx, kw, kb = jax.random.split(key, 3)
    x = jax.random.normal(kx, (B, C, H, W), dtype=jnp.float32)
    # Non-trivial affine params to exercise the scale/shift path.
    weight = jnp.ones((C,), dtype=jnp.float32) + 0.1 * jax.random.normal(kw, (C,), jnp.float32)
    bias = 0.1 * jax.random.normal(kb, (C,), jnp.float32)

    out = jax.block_until_ready(layernorm2d(x, weight, bias, eps=1e-6))

    # Reference check (plain JAX) to confirm semantics.
    u = x.mean(axis=1, keepdims=True)
    s = ((x - u) ** 2).mean(axis=1, keepdims=True)
    ref = (x - u) / jnp.sqrt(s + 1e-6)
    ref = weight[None, :, None, None] * ref + bias[None, :, None, None]
    assert jnp.allclose(out, ref, atol=1e-5, rtol=1e-5), float(jnp.max(jnp.abs(out - ref)))

    print("KERNEL_OK")
</pallas_src>

<mosaic_0001>
module attributes {stable_mosaic.version = 11 : i64} {
  func.func @_layernorm2d_kernel(%arg0: i32, %arg1: i32, %arg2: memref<2x4x256xf32, #tpu.memory_space<vmem>>, %arg3: memref<4x1xf32, #tpu.memory_space<vmem>>, %arg4: memref<4x1xf32, #tpu.memory_space<vmem>>, %arg5: memref<2x4x256xf32, #tpu.memory_space<vmem>>) attributes {dimension_semantics = [#tpu.dimension_semantics<parallel>, #tpu.dimension_semantics<parallel>], iteration_bounds = array<i64: 1, 1>, scalar_prefetch = 0 : i64, scratch_operands = 0 : i64, tpu.core_type = #tpu.core_type<tc>, window_params = [{transform_indices = @transform_0, window_bounds = array<i64: 2, 4, 256>}, {pipeline_mode = #tpu.pipeline_mode<synchronous>, transform_indices = @transform_1, window_bounds = array<i64: 4, 1>}, {pipeline_mode = #tpu.pipeline_mode<synchronous>, transform_indices = @transform_2, window_bounds = array<i64: 4, 1>}, {transform_indices = @transform_3, window_bounds = array<i64: 2, 4, 256>}]} {
    %c0 = arith.constant 0 : index
    %c0_0 = arith.constant 0 : index
    %c0_1 = arith.constant 0 : index
    %0 = vector.load %arg2[%c0, %c0_0, %c0_1] : memref<2x4x256xf32, #tpu.memory_space<vmem>>, vector<2x4x256xf32>
    %cst = arith.constant dense<0.000000e+00> : vector<2x256xf32>
    %1 = vector.multi_reduction <add>, %0, %cst [1] : vector<2x4x256xf32> to vector<2x256xf32>
    %2 = vector.shape_cast %1 : vector<2x256xf32> to vector<2x1x256xf32>
    %cst_2 = arith.constant 4.000000e+00 : f32
    %3 = vector.broadcast %cst_2 : f32 to vector<2x1x256xf32>
    %4 = arith.divf %2, %3 : vector<2x1x256xf32>
    %5 = vector.broadcast %4 : vector<2x1x256xf32> to vector<2x4x256xf32>
    %6 = arith.subf %0, %5 : vector<2x4x256xf32>
    %7 = arith.mulf %6, %6 : vector<2x4x256xf32>
    %cst_3 = arith.constant dense<0.000000e+00> : vector<2x256xf32>
    %8 = vector.multi_reduction <add>, %7, %cst_3 [1] : vector<2x4x256xf32> to vector<2x256xf32>
    %9 = vector.shape_cast %8 : vector<2x256xf32> to vector<2x1x256xf32>
    %cst_4 = arith.constant 4.000000e+00 : f32
    %10 = vector.broadcast %cst_4 : f32 to vector<2x1x256xf32>
    %11 = arith.divf %9, %10 : vector<2x1x256xf32>
    %cst_5 = arith.constant 9.99999997E-7 : f32
    %12 = vector.broadcast %cst_5 : f32 to vector<2x1x256xf32>
    %13 = arith.addf %11, %12 : vector<2x1x256xf32>
    %14 = math.rsqrt %13 : vector<2x1x256xf32>
    %15 = vector.broadcast %14 : vector<2x1x256xf32> to vector<2x4x256xf32>
    %16 = arith.mulf %6, %15 : vector<2x4x256xf32>
    %c0_6 = arith.constant 0 : index
    %c0_7 = arith.constant 0 : index
    %17 = vector.load %arg3[%c0_6, %c0_7] : memref<4x1xf32, #tpu.memory_space<vmem>>, vector<4x1xf32>
    %c0_8 = arith.constant 0 : index
    %c0_9 = arith.constant 0 : index
    %18 = vector.load %arg4[%c0_8, %c0_9] : memref<4x1xf32, #tpu.memory_space<vmem>>, vector<4x1xf32>
    %19 = vector.shape_cast %17 : vector<4x1xf32> to vector<1x4x1xf32>
    %20 = vector.broadcast %19 : vector<1x4x1xf32> to vector<2x4x256xf32>
    %21 = arith.mulf %20, %16 : vector<2x4x256xf32>
    %22 = vector.shape_cast %18 : vector<4x1xf32> to vector<1x4x1xf32>
    %23 = vector.broadcast %22 : vector<1x4x1xf32> to vector<2x4x256xf32>
    %24 = arith.addf %21, %23 : vector<2x4x256xf32>
    %c0_10 = arith.constant 0 : index
    %c0_11 = arith.constant 0 : index
    %c0_12 = arith.constant 0 : index
    %25 = vector.load %arg5[%c0_10, %c0_11, %c0_12] : memref<2x4x256xf32, #tpu.memory_space<vmem>>, vector<2x4x256xf32>
    tpu.vector_store %arg5[%c0_10, %c0_11, %c0_12], %24 {strides = array<i32>} : memref<2x4x256xf32, #tpu.memory_space<vmem>>, vector<2x4x256xf32>,
    return
  }
  func.func @transform_0(%arg0: i32, %arg1: i32) -> (i32, i32, i32) {
    %c0_i32 = arith.constant 0 : i32
    %c0_i32_0 = arith.constant 0 : i32
    return %arg0, %c0_i32, %arg1 : i32, i32, i32
  }
  func.func @transform_1(%arg0: i32, %arg1: i32) -> (i32, i32) {
    %c0_i32 = arith.constant 0 : i32
    %c0_i32_0 = arith.constant 0 : i32
    %c0_i32_1 = arith.constant 0 : i32
    return %c0_i32, %c0_i32_0 : i32, i32
  }
  func.func @transform_2(%arg0: i32, %arg1: i32) -> (i32, i32) {
    %c0_i32 = arith.constant 0 : i32
    %c0_i32_0 = arith.constant 0 : i32
    %c0_i32_1 = arith.constant 0 : i32
    return %c0_i32, %c0_i32_0 : i32, i32
  }
  func.func @transform_3(%arg0: i32, %arg1: i32) -> (i32, i32, i32) {
    %c0_i32 = arith.constant 0 : i32
    %c0_i32_0 = arith.constant 0 : i32
    return %arg0, %c0_i32, %arg1 : i32, i32, i32
  }
}

</mosaic_0001>

<llo_original>
// kernel: tpu_custom_call.1
$region0: #{tpu_custom_call.1}
  #allocation0 [shape = 'u32[]', space=smem, size = 0x4, offset = 0x4, fixed_abs, tag = 'smem constant byte address 0x4 - core index']
  #allocation1 [shape = 'u32[72,128]{1,0:T(1,128)}', space=vmem, size = 0x9000, scoped, tag = 'internal scratch']
  %s0 = inlined_call_operand.hbm [shape: f32[2,4,256], index: 0, kind: input, shape index: {}]
  %s1 = inlined_call_operand.vmem [shape: f32[4,1], index: 1, kind: input, shape index: {}]
  %s2 = inlined_call_operand.vmem [shape: f32[4,1], index: 2, kind: input, shape index: {}]
  %s3 = inlined_call_operand.hbm [shape: f32[2,4,256], index: 3, kind: output, shape index: {}]
  %s4 = sld [smem:[#allocation0]]
  $region26: #{tpu_custom_call.1} parent=0
    _
  %s6 = ssub.s32 1, %s4
  %s7 = scalar_select 0, %s6, %s4
  $region1: #{tpu_custom_call.1} parent=0
    #allocation2 [shape = 'u8[8192]{0}', space=vmem, size = 0x2000, scoped, tag = 'input window, operand 0, single buffered']
    #allocation3 [shape = 's32[1]{0}', space=sflag, size = 0x4, scoped, tag = 'scoped memory for tpu_custom_call.1']
    #allocation4 [shape = 's32[1]{0}', space=sflag, size = 0x4, scoped, tag = 'scoped memory for tpu_custom_call.1']
    #allocation5 [shape = 'u8[8192]{0}', space=vmem, size = 0x2000, scoped, tag = 'output window, operand 0, single buffered']
    %8 = vsyncpa [#allocation3], 0
    %9 = vsyncpa [#allocation4], 0
    // Predicated region
    $region2: #{tpu_custom_call.1} parent=1 // pred_check
      _
    $region3: #{tpu_custom_call.1} parent=1 // pred_check_branch
      %11 = sbr.rel (0) target = $region5
    $region4: #{tpu_custom_call.1} parent=1 // pred_region
      %13 = vsyncadd [#allocation3], 0
      %s14 = sshll.u32 %s0, 4
      %s15 = int_to_ptr.hbm [resolvable:$true] %s14
      %s16 = sshll.u32 [#allocation2], 4
      %s17 = int_to_ptr.vmem [resolvable:$true] %s16
      %22 = dma.hbm_to_vmem [thread:$0]  %s15, 256, %s17, [#allocation3], 128, 128, 8
    $region5: #{tpu_custom_call.1} parent=1 // pred_fallthru
      _
    // Predicated region
    $region6: #{tpu_custom_call.1} parent=1 // pred_check
      _
    $region7: #{tpu_custom_call.1} parent=1 // pred_check_branch
      %24 = sbr.rel (0) target = $region9
    $region8: #{tpu_custom_call.1} parent=1 // pred_region
      _
    $region9: #{tpu_custom_call.1} parent=1 // pred_fallthru
      _
    // Predicated region
    $region10: #{tpu_custom_call.1} parent=1 // pred_check
      _
    $region11: #{tpu_custom_call.1} parent=1 // pred_check_branch
      %26 = sbr.rel (0) target = $region13
    $region12: #{tpu_custom_call.1} parent=1 // pred_region
      _
    $region13: #{tpu_custom_call.1} parent=1 // pred_fallthru
      _
    // Predicated region
    $region14: #{tpu_custom_call.1} parent=1 // pred_check
      _
    $region15: #{tpu_custom_call.1} parent=1 // pred_check_branch
      %28 = sbr.rel (0) target = $region17
    $region16: #{tpu_custom_call.1} parent=1 // pred_region
      %30 = dma.done [#allocation3], 256
    $region17: #{tpu_custom_call.1} parent=1 // pred_fallthru
      _
    %v31 = vld [vmem:[#allocation2] sm:$0xff]
    %v32 = vld [vmem:[#allocation2 + $0x8] sm:$0xff]
    %35 = vst [vmem:[#allocation1] ss:$2 sm:$0xff] %v31
    %v36 = vld.sshfl [vmem:[#allocation1] sm:$0xff pattern:$0x75316420]
    %v37 = vld.sshfl [vmem:[#allocation1 + $0x8] sm:$0xff pattern:$0x75316420]
    %s38 = scalar_lea.vmem [#allocation1], 16
    %39 = vst [vmem:[%s38] ss:$2 sm:$0xff] %v32
    %v40 = vld.sshfl [vmem:[#allocation1 + $0x10] sm:$0xff pattern:$0x75316420]
    %v41 = vld.sshfl [vmem:[#allocation1 + $0x18] sm:$0xff pattern:$0x75316420]
    %vm46 = vcmask 1043456
    %v47 = vsel %vm46, %v36, 0.0
    %v48 = vrot.slane %v47, 4
    %v49 = vadd.f32 %v47, %v48
    %v50 = vrot.slane %v49, 2
    %v51 = vadd.f32 %v49, %v50
    %v52 = vrot.slane %v51, 1
    %v53 = vadd.f32 %v51, %v52
    %v54 = vsel %vm46, %v37, 0.0
    %v55 = vrot.slane %v54, 4
    %v56 = vadd.f32 %v54, %v55
    %v57 = vrot.slane %v56, 2
    %v58 = vadd.f32 %v56, %v57
    %v59 = vrot.slane %v58, 1
    %v60 = vadd.f32 %v58, %v59
    %v61 = vsel %vm46, %v40, 0.0
    %v62 = vrot.slane %v61, 4
    %v63 = vadd.f32 %v61, %v62
    %v64 = vrot.slane %v63, 2
    %v65 = vadd.f32 %v63, %v64
    %v66 = vrot.slane %v65, 1
    %v67 = vadd.f32 %v65, %v66
    %v68 = vsel %vm46, %v41, 0.0
    %v69 = vrot.slane %v68, 4
    %v70 = vadd.f32 %v68, %v69
    %v71 = vrot.slane %v70, 2
    %v72 = vadd.f32 %v70, %v71
    %v73 = vrot.slane %v72, 1
    %v74 = vadd.f32 %v72, %v73
    %v75 = vrcp.pop 4.0
    %v76 = vmul.f32 4.0, %v75
    %v77 = vsub.f32 1.0, %v76
    %v78 = vmul.f32 %v75, %v77
    %v79 = vadd.f32 %v75, %v78
    %vm80 = vweird.f32 %v75
    %v81 = vsel %vm80, %v75, %v79
    %v82 = vmul.f32 %v53, %v81
    %v83 = vmul.f32 %v60, %v81
    %v84 = vmul.f32 %v67, %v81
    %v85 = vmul.f32 %v74, %v81
    %v90 = vrot.slane %v83, 4
    %v91 = vrot.slane %v85, 4
    %v92 = vsel %vm46, %v82, %v90
    %v93 = vsel %vm46, %v84, %v91
    %v96 = vsub.f32 %v31, %v92
    %v97 = vsub.f32 %v32, %v93
    %v98 = vmul.f32 %v96, %v96
    %v99 = vmul.f32 %v97, %v97
    %102 = vst [vmem:[#allocation1] ss:$2 sm:$0xff] %v98
    %v103 = vld.sshfl [vmem:[#allocation1] sm:$0xff pattern:$0x75316420]
    %v104 = vld.sshfl [vmem:[#allocation1 + $0x8] sm:$0xff pattern:$0x75316420]
    %s105 = scalar_lea.vmem [#allocation1], 16
    %106 = vst [vmem:[%s105] ss:$2 sm:$0xff] %v99
    %v107 = vld.sshfl [vmem:[#allocation1 + $0x10] sm:$0xff pattern:$0x75316420]
    %v108 = vld.sshfl [vmem:[#allocation1 + $0x18] sm:$0xff pattern:$0x75316420]
    %v113 = vsel %vm46, %v103, 0.0
    %v114 = vrot.slane %v113, 4
    %v115 = vadd.f32 %v113, %v114
    %v116 = vrot.slane %v115, 2
    %v117 = vadd.f32 %v115, %v116
    %v118 = vrot.slane %v117, 1
    %v119 = vadd.f32 %v117, %v118
    %v120 = vsel %vm46, %v104, 0.0
    %v121 = vrot.slane %v120, 4
    %v122 = vadd.f32 %v120, %v121
    %v123 = vrot.slane %v122, 2
    %v124 = vadd.f32 %v122, %v123
    %v125 = vrot.slane %v124, 1
    %v126 = vadd.f32 %v124, %v125
    %v127 = vsel %vm46, %v107, 0.0
    %v128 = vrot.slane %v127, 4
    %v129 = vadd.f32 %v127, %v128
    %v130 = vrot.slane %v129, 2
    %v131 = vadd.f32 %v129, %v130
    %v132 = vrot.slane %v131, 1
    %v133 = vadd.f32 %v131, %v132
    %v134 = vsel %vm46, %v108, 0.0
    %v135 = vrot.slane %v134, 4
    %v136 = vadd.f32 %v134, %v135
    %v137 = vrot.slane %v136, 2
    %v138 = vadd.f32 %v136, %v137
    %v139 = vrot.slane %v138, 1
    %v140 = vadd.f32 %v138, %v139
    %v141 = vmul.f32 %v119, %v81
    %v142 = vmul.f32 %v126, %v81
    %v143 = vmul.f32 %v133, %v81
    %v144 = vmul.f32 %v140, %v81
    %v145 = vadd.f32 %v141, 1e-06
    %v146 = vadd.f32 %v142, 1e-06
    %v147 = vadd.f32 %v143, 1e-06
    %v148 = vadd.f32 %v144, 1e-06
    %v149 = vrsqrt.pop %v145
    %v150 = vmul.f32 %v149, %v145
    %v151 = vmul.f32 %v150, %v149
    %v152 = vmul.f32 0.5, %v151
    %v153 = vsub.f32 1.5, %v152
    %v154 = vmul.f32 %v149, %v153
    %vm155 = vweird.f32 %v145
    %vm156 = vweird.f32 %v149
    %vm157 = vmor %vm155, %vm156
    %v158 = vsel %vm157, %v149, %v154
    %v159 = vrsqrt.pop %v146
    %v160 = vmul.f32 %v159, %v146
    %v161 = vmul.f32 %v160, %v159
    %v162 = vmul.f32 0.5, %v161
    %v163 = vsub.f32 1.5, %v162
    %v164 = vmul.f32 %v159, %v163
    %vm165 = vweird.f32 %v146
    %vm166 = vweird.f32 %v159
    %vm167 = vmor %vm165, %vm166
    %v168 = vsel %vm167, %v159, %v164
    %v169 = vrsqrt.pop %v147
    %v170 = vmul.f32 %v169, %v147
    %v171 = vmul.f32 %v170, %v169
    %v172 = vmul.f32 0.5, %v171
    %v173 = vsub.f32 1.5, %v172
    %v174 = vmul.f32 %v169, %v173
    %vm175 = vweird.f32 %v147
    %vm176 = vweird.f32 %v169
    %vm177 = vmor %vm175, %vm176
    %v178 = vsel %vm177, %v169, %v174
    %v179 = vrsqrt.pop %v148
    %v180 = vmul.f32 %v179, %v148
    %v181 = vmul.f32 %v180, %v179
    %v182 = vmul.f32 0.5, %v181
    %v183 = vsub.f32 1.5, %v182
    %v184 = vmul.f32 %v179, %v183
    %vm185 = vweird.f32 %v148
    %vm186 = vweird.f32 %v179
    %vm187 = vmor %vm185, %vm186
    %v188 = vsel %vm187, %v179, %v184
    %v193 = vrot.slane %v168, 4
    %v194 = vrot.slane %v188, 4
    %v195 = vsel %vm46, %v158, %v193
    %v196 = vsel %vm46, %v178, %v194
    %v199 = vmul.f32 %v96, %v195
    %v200 = vmul.f32 %v97, %v196
    %v201 = vld [vmem:[%s1] sm:$0xf]
    %v202 = vld [vmem:[%s2] sm:$0xf]
    %204 = vset.pattern.permute.xlu0 0
    %205 = vperm.xlu0 %204, %v201
    %v206 = vpop.permute.xlu0 %205
    %210 = vst [vmem:[#allocation1] ss:$2 sm:$0xff] %v199
    %v211 = vld.sshfl [vmem:[#allocation1] sm:$0xff pattern:$0x75316420]
    %v212 = vld.sshfl [vmem:[#allocation1 + $0x8] sm:$0xff pattern:$0x75316420]
    %s213 = scalar_lea.vmem [#allocation1], 16
    %214 = vst [vmem:[%s213] ss:$2 sm:$0xff] %v200
    %v215 = vld.sshfl [vmem:[#allocation1 + $0x10] sm:$0xff pattern:$0x75316420]
    %v216 = vld.sshfl [vmem:[#allocation1 + $0x18] sm:$0xff pattern:$0x75316420]
    %v221 = vmul.f32 %v206, %v211
    %v222 = vmul.f32 %v206, %v212
    %v223 = vmul.f32 %v206, %v215
    %v224 = vmul.f32 %v206, %v216
    %226 = vset.pattern.permute.xlu0 0
    %227 = vperm.xlu0 %226, %v202
    %v228 = vpop.permute.xlu0 %227
    %v230 = vadd.f32 %v221, %v228
    %v231 = vadd.f32 %v222, %v228
    %v232 = vadd.f32 %v223, %v228
    %v233 = vadd.f32 %v224, %v228
    %v238 = vrot.slane %v231, 4
    %v239 = vrot.slane %v233, 4
    %v240 = vsel %vm46, %v230, %v238
    %v241 = vsel %vm46, %v232, %v239
    %244 = vst [vmem:[#allocation5] sm:$0xff] %v240
    %245 = vst [vmem:[#allocation5 + $0x8] sm:$0xff] %v241
    // Predicated region
    $region18: #{tpu_custom_call.1} parent=1 // pred_check
      _
    $region19: #{tpu_custom_call.1} parent=1 // pred_check_branch
      %247 = sbr.rel (0) target = $region21
    $region20: #{tpu_custom_call.1} parent=1 // pred_region
      %249 = vsyncadd [#allocation4], 0
      %s250 = sshll.u32 [#allocation5], 4
      %s251 = int_to_ptr.vmem [resolvable:$true] %s250
      %s252 = sshll.u32 %s3, 4
      %s253 = int_to_ptr.hbm [resolvable:$true] %s252
      %258 = dma.vmem_to_hbm [thread:$0]  %s251, 256, %s253, [#allocation4], 128, 128, 8
    $region21: #{tpu_custom_call.1} parent=1 // pred_fallthru
      _
    // Predicated region
    $region22: #{tpu_custom_call.1} parent=1 // pred_check
      _
    $region23: #{tpu_custom_call.1} parent=1 // pred_check_branch
      %260 = sbr.rel (0) target = $region25
    $region24: #{tpu_custom_call.1} parent=1 // pred_region
      %262 = dma.done [#allocation4], 256
    $region25: #{tpu_custom_call.1} parent=1 // pred_fallthru
      _
    %263 = vsyncpa [#allocation3], 1
    %264 = vsyncpa [#allocation4], 1

</llo_original>
